<compile_context>
chip_gen: v5e
topology: v5e:2x2
jax: 0.10.0
libtpu: 0.0.40
codegen_flags: <defaults>
</compile_context>

<pallas_src>
import functools

import jax
import jax.numpy as jnp
import numpy as np
from jax import lax
from jax.experimental import pallas as pl
from jax.experimental.pallas import tpu as pltpu


def _round_up(x, m):
    return ((x + m - 1) // m) * m


# ----------------------------------------------------------------------------
# Plain-JAX glue: farthest point sampling, kNN / ball-query grouping
# ----------------------------------------------------------------------------
def square_distance(src, dst):
    # src: [B, N, C], dst: [B, M, C] -> [B, N, M]
    return jnp.sum((src[:, :, None, :] - dst[:, None, :, :]) ** 2, axis=-1)


def farthest_point_sample(xyz, npoint, key):
    # xyz: [B, N, 3] -> centroids: [B, npoint] int32
    B, N, _ = xyz.shape
    distance0 = jnp.full((B, N), 1e10, dtype=jnp.float32)
    farthest0 = jax.random.randint(key, (B,), 0, N, dtype=jnp.int32)
    centroids0 = jnp.zeros((B, npoint), dtype=jnp.int32)

    def body(i, carry):
        centroids, distance, farthest = carry
        centroids = centroids.at[:, i].set(farthest)
        centroid = jnp.take_along_axis(xyz, farthest[:, None, None], axis=1)  # [B,1,3]
        dist = jnp.sum((xyz - centroid) ** 2, axis=-1)                        # [B,N]
        distance = jnp.minimum(distance, dist)
        farthest = jnp.argmax(distance, axis=-1).astype(jnp.int32)
        return centroids, distance, farthest

    centroids, _, _ = lax.fori_loop(0, npoint, body, (centroids0, distance0, farthest0))
    return centroids


def query_ball_point(radius, nsample, xyz, new_xyz):
    # xyz: [B, N, 3], new_xyz: [B, S, 3] -> idx: [B, S, nsample]
    B, N, _ = xyz.shape
    S = new_xyz.shape[1]
    group_idx = jnp.broadcast_to(jnp.arange(N, dtype=jnp.int32), (B, S, N))
    sqrdists = square_distance(new_xyz, xyz)
    group_idx = jnp.where(sqrdists > radius ** 2, N, group_idx)
    group_idx = jnp.sort(group_idx, axis=-1)[:, :, :nsample]
    group_first = jnp.broadcast_to(group_idx[:, :, :1], group_idx.shape)
    group_idx = jnp.where(group_idx == N, group_first, group_idx)
    return group_idx


# ----------------------------------------------------------------------------
# Pallas kernel: per-point linear (1x1 conv) + max over nsample + LayerNorm
# ----------------------------------------------------------------------------
def _group_linear_max_ln_kernel(x_ref, nxyz_ref, w_ref, p_ref, o_ref,
                                *, nsample, cin_pad, eps):
    # x_ref    : [TS, nsample*cin_pad]  bf16  (gathered [xyz(3), voxels(C), 0-pad])
    # nxyz_ref : [TS, cin_pad]          bf16  (FPS centres, zero-padded channels)
    # w_ref    : [cin_pad, Cout]        bf16  (1x1 conv weight; rows 0:3 = xyz part)
    # p_ref    : [3, Cout]              f32   (rows: conv bias, LN gamma, LN beta)
    # o_ref    : [TS, Cout]             f32
    w = w_ref[...]

    def nb(j):  # j is a static Python int -> static lane slice, one K=cin_pad dot
        xj = x_ref[:, j * cin_pad:(j + 1) * cin_pad]                     # [TS, cin_pad]
        return jnp.dot(xj, w, preferred_element_type=jnp.float32)       # [TS, Cout]

    # Two interleaved running-max accumulators break the pop->max->pop chain.
    # (For very large nsample this unrolled loop could move to a fori_loop.)
    m0 = nb(0)
    m1 = nb(1) if nsample > 1 else m0
    for j in range(2, nsample, 2):
        m0 = jnp.maximum(m0, nb(j))
        if j + 1 < nsample:
            m1 = jnp.maximum(m1, nb(j + 1))
    m = jnp.maximum(m0, m1)

    # xyz-norm correction: conv(gx - nx) == conv(gx) - W_xyz^T nx, and the
    # correction is neighbour-independent so it commutes with the max.
    # nxyz is zero-padded beyond channel 3, so dot(nxyz, W) == dot(nx, W[:3]).
    corr = jnp.dot(nxyz_ref[...], w, preferred_element_type=jnp.float32)  # [TS, Cout]
    p = p_ref[...]
    m = m - corr + p[0:1, :]          # conv bias after the max (constant over nsample)

    # LayerNorm over the real Cout channels (no channel padding in this
    # orientation -> plain mean; two-pass centered variance for stability).
    mu = jnp.mean(m, axis=-1, keepdims=True)
    d = m - mu
    var = jnp.mean(d * d, axis=-1, keepdims=True)
    normed = d * lax.rsqrt(var + eps)
    o_ref[...] = (normed * p[1:2, :] + p[2:3, :]).astype(o_ref.dtype)


def _vmem_block_bytes(ts, ns_cin_pad, cin_pad, cout):
    lane = lambda c: _round_up(c, 128)
    x_blk = ts * lane(ns_cin_pad) * 2          # bf16
    nx_blk = ts * lane(cin_pad) * 2            # bf16
    out_blk = ts * lane(cout) * 4              # f32
    scratch = 6 * ts * lane(cout) * 4          # max accumulators / LN temps (rough)
    return 2 * (x_blk + nx_blk + out_blk) + scratch


def _choose_tile(S, ns_cin_pad, cin_pad, cout, ts_target, budget_bytes=20 * 2 ** 20):
    # S sits on the sublane dim of every block -> TS only needs a multiple of 16.
    if S <= ts_target:
        ts = _round_up(S, 16)
    else:
        ts = _round_up(ts_target, 16)
    while _vmem_block_bytes(ts, ns_cin_pad, cin_pad, cout) > budget_bytes and ts > 16:
        ts = _round_up(max(16, ts // 2), 16)
    s_pad = _round_up(S, ts)
    return ts, s_pad


def grouped_conv_max_ln(x_feat, nxyz_feat, w_pad, ln_params, *, nsample, cin_pad,
                        ts, s_pad, cout):
    """x_feat: [B, S_pad, nsample*cin_pad] bf16 -> [B, S_pad, Cout] f32."""
    B = x_feat.shape[0]
    n_tiles = s_pad // ts
    ns_cin = nsample * cin_pad

    kernel = functools.partial(_group_linear_max_ln_kernel,
                               nsample=nsample, cin_pad=cin_pad, eps=1e-5)

    return pl.pallas_call(
        kernel,
        out_shape=jax.ShapeDtypeStruct((B, s_pad, cout), jnp.float32),
        grid=(B, n_tiles),
        in_specs=[
            pl.BlockSpec((None, ts, ns_cin), lambda b, si: (b, si, 0)),
            pl.BlockSpec((None, ts, cin_pad), lambda b, si: (b, si, 0)),
            pl.BlockSpec((cin_pad, cout), lambda b, si: (0, 0)),
            pl.BlockSpec((3, cout), lambda b, si: (0, 0)),
        ],
        out_specs=pl.BlockSpec((None, ts, cout), lambda b, si: (b, si, 0)),
        compiler_params=pltpu.CompilerParams(
            dimension_semantics=("parallel", "parallel"),
            vmem_limit_bytes=32 * 1024 * 1024),
    )(x_feat, nxyz_feat, w_pad, ln_params)


# ----------------------------------------------------------------------------
# Module-equivalent forward
# ----------------------------------------------------------------------------
def fps_voxels_embedding_forward(xyz, voxels, params, *, npoint, nsample,
                                 knn=True, radius=0.0, fps_key=None, ts_target=512):
    """Equivalent of FPS_VoxelsEmbedding.forward.

    xyz:    [B, N, 3] f32
    voxels: [B, N, C] f32
    returns (new_points [B, npoint, out_chan] f32, new_xyz [B, npoint, 3] f32)
    """
    B, N, C = voxels.shape
    S = npoint
    Cin = C + 3
    Cin_pad = _round_up(Cin, 8)
    w = params["w"]
    Cout = w.shape[1]
    if fps_key is None:
        fps_key = jax.random.PRNGKey(1)

    # ---- data-dependent sampling / grouping (XLA glue) -----------------------
    # TODO(synk): FPS / kNN / gather remain XLA ops (data-dependent indexing).
    fps_idx = farthest_point_sample(xyz, S, fps_key)                      # [B, S]
    take_rows = jax.vmap(lambda a, i: a[i])
    new_xyz = take_rows(xyz, fps_idx)                                     # [B, S, 3]

    if knn:
        dists = square_distance(new_xyz, xyz)
        idx = jnp.argsort(dists, axis=-1)[:, :, :nsample].astype(jnp.int32)
    else:
        idx = query_ball_point(radius, nsample, xyz, new_xyz)             # [B, S, ns]

    # ---- layout for the Pallas kernel ----------------------------------------
    ts, s_pad = _choose_tile(S, nsample * Cin_pad, Cin_pad, Cout, ts_target)
    if s_pad != S:
        # Pad the (small) index / centre arrays instead of the big gathered tensor.
        idx = jnp.pad(idx, ((0, 0), (0, s_pad - S), (0, 0)))              # idx 0 is valid
        nxyz_p = jnp.pad(new_xyz, ((0, 0), (0, s_pad - S), (0, 0)))
    else:
        nxyz_p = new_xyz

    # Channel-concat + channel-pad + bf16 cast on the SMALL pre-gather source so
    # the big gathered tensor is written exactly once, already in kernel layout.
    src = jnp.concatenate(
        [xyz, voxels, jnp.zeros((B, N, Cin_pad - Cin), xyz.dtype)], axis=-1
    ).astype(jnp.bfloat16)                                                # [B, N, Cin_pad]
    x_feat = take_rows(src, idx)                                          # [B, S_pad, ns, Cin_pad]
    x_feat = x_feat.reshape(B, s_pad, nsample * Cin_pad)                  # contiguous collapse

    # FPS centres, zero-padded to Cin_pad channels (dot(nxyz, W) == dot(nx, W[:3])).
    nxyz_feat = jnp.pad(nxyz_p, ((0, 0), (0, 0), (0, Cin_pad - 3))).astype(jnp.bfloat16)

    w_pad = jnp.pad(w, ((0, Cin_pad - Cin), (0, 0))).astype(jnp.bfloat16)  # [Cin_pad, Cout]
    ln_params = jnp.stack([params["b"], params["gamma"], params["beta"]]
                          ).astype(jnp.float32)                            # [3, Cout]

    out = grouped_conv_max_ln(x_feat, nxyz_feat, w_pad, ln_params,
                              nsample=nsample, cin_pad=Cin_pad,
                              ts=ts, s_pad=s_pad, cout=Cout)
    if s_pad != S:
        out = out[:, :S]
    return out, new_xyz


# ----------------------------------------------------------------------------
# Pure-JAX reference for the Pallas hot path (same bf16 input quantization)
# ----------------------------------------------------------------------------
def _reference(xyz, voxels, new_xyz, idx, params):
    take_rows = jax.vmap(lambda a, i: a[i])
    src = jnp.concatenate([xyz, voxels], axis=-1)
    src_q = src.astype(jnp.bfloat16).astype(jnp.float32)
    g = take_rows(src_q, idx)                                             # [B, S, ns, Cin]
    w = params["w"].astype(jnp.bfloat16).astype(jnp.float32)              # [Cin, Cout]
    y = jnp.einsum("bsnc,co->bsno", g, w, precision=lax.Precision.HIGHEST)
    m = jnp.max(y, axis=2)                                                # [B, S, Cout]
    nxyz_q = new_xyz.astype(jnp.bfloat16).astype(jnp.float32)
    corr = jnp.einsum("bsd,do->bso", nxyz_q, w[:3],
                      precision=lax.Precision.HIGHEST)
    m = m - corr + params["b"][None, None, :]
    mu = jnp.mean(m, axis=-1, keepdims=True)
    d = m - mu
    var = jnp.mean(d * d, axis=-1, keepdims=True)
    return d * lax.rsqrt(var + 1e-5) * params["gamma"] + params["beta"]


if __name__ == "__main__":
    # Small shapes consistent with the module.
    B, N, C = 2, 16, 4          # batch, points, in_channel
    npoint, nsample = 8, 4      # S, neighbours per group
    out_chan = 32
    Cin = C + 3                 # grouped_xyz_norm (3) concat grouped_points (C)

    key = jax.random.PRNGKey(0)
    k_xyz, k_vox, k_w, k_b, k_g, k_be, k_fps = jax.random.split(key, 7)

    xyz = jax.random.normal(k_xyz, (B, N, 3), dtype=jnp.float32)
    voxels = jax.random.normal(k_vox, (B, N, C), dtype=jnp.float32)

    params = {
        "w": jax.random.normal(k_w, (Cin, out_chan), dtype=jnp.float32) * 0.1,
        "b": jax.random.normal(k_b, (out_chan,), dtype=jnp.float32) * 0.1,
        "gamma": 1.0 + 0.1 * jax.random.normal(k_g, (out_chan,), dtype=jnp.float32),
        "beta": 0.05 * jax.random.normal(k_be, (out_chan,), dtype=jnp.float32),
    }

    new_points, new_xyz = fps_voxels_embedding_forward(
        xyz, voxels, params, npoint=npoint, nsample=nsample, knn=True,
        radius=0.0, fps_key=k_fps)
    new_points = jax.block_until_ready(new_points)
    new_xyz = jax.block_until_ready(new_xyz)

    # Rebuild the same grouping with the same glue code and check the hot path.
    fps_idx = farthest_point_sample(xyz, npoint, k_fps)
    take_rows = jax.vmap(lambda a, i: a[i])
    ref_new_xyz = take_rows(xyz, fps_idx)
    dists = square_distance(ref_new_xyz, xyz)
    ref_idx = jnp.argsort(dists, axis=-1)[:, :, :nsample].astype(jnp.int32)
    ref = _reference(xyz, voxels, ref_new_xyz, ref_idx, params)

    np.testing.assert_allclose(np.asarray(new_points), np.asarray(ref),
                               rtol=1e-3, atol=1e-3)
    np.testing.assert_allclose(np.asarray(new_xyz), np.asarray(ref_new_xyz),
                               rtol=0, atol=0)
    assert new_points.shape == (B, npoint, out_chan)
    assert new_xyz.shape == (B, npoint, 3)

    print("KERNEL_OK")
</pallas_src>

<mosaic_0001>
module attributes {stable_mosaic.version = 11 : i64} {
  func.func @_group_linear_max_ln_kernel(%arg0: i32, %arg1: i32, %arg2: memref<1x16x32xbf16, #tpu.memory_space<vmem>>, %arg3: memref<1x16x8xbf16, #tpu.memory_space<vmem>>, %arg4: memref<8x32xbf16, #tpu.memory_space<vmem>>, %arg5: memref<3x32xf32, #tpu.memory_space<vmem>>, %arg6: memref<1x16x32xf32, #tpu.memory_space<vmem>>) attributes {dimension_semantics = [#tpu.dimension_semantics<parallel>, #tpu.dimension_semantics<parallel>], iteration_bounds = array<i64: 2, 1>, scalar_prefetch = 0 : i64, scratch_operands = 0 : i64, tpu.core_type = #tpu.core_type<tc>, window_params = [{transform_indices = @transform_0, window_bounds = array<i64: 1, 16, 32>}, {transform_indices = @transform_1, window_bounds = array<i64: 1, 16, 8>}, {pipeline_mode = #tpu.pipeline_mode<synchronous>, transform_indices = @transform_2, window_bounds = array<i64: 8, 32>}, {pipeline_mode = #tpu.pipeline_mode<synchronous>, transform_indices = @transform_3, window_bounds = array<i64: 3, 32>}, {transform_indices = @transform_4, window_bounds = array<i64: 1, 16, 32>}]} {
    %c0 = arith.constant 0 : index
    %c0_0 = arith.constant 0 : index
    %0 = vector.load %arg4[%c0, %c0_0] : memref<8x32xbf16, #tpu.memory_space<vmem>>, vector<8x32xbf16>
    %c0_1 = arith.constant 0 : index
    %c0_2 = arith.constant 0 : index
    %c0_3 = arith.constant 0 : index
    %1 = vector.load %arg2[%c0_1, %c0_2, %c0_3] : memref<1x16x32xbf16, #tpu.memory_space<vmem>>, vector<1x16x8xbf16>
    %2 = vector.shape_cast %1 : vector<1x16x8xbf16> to vector<16x8xbf16>
    %cst = arith.constant dense<0.000000e+00> : vector<16x32xf32>
    %3 = tpu.matmul %2, %0, %cst {dimension_numbers = #tpu.dot_dimension_numbers<[1], [0], [0], [1], [0, 0, 1, 1], [], []>} : vector<16x8xbf16>, vector<8x32xbf16>, vector<16x32xf32> -> vector<16x32xf32>
    %c0_4 = arith.constant 0 : index
    %c0_5 = arith.constant 0 : index
    %c8 = arith.constant 8 : index
    %4 = vector.load %arg2[%c0_4, %c0_5, %c8] : memref<1x16x32xbf16, #tpu.memory_space<vmem>>, vector<1x16x8xbf16>
    %5 = vector.shape_cast %4 : vector<1x16x8xbf16> to vector<16x8xbf16>
    %cst_6 = arith.constant dense<0.000000e+00> : vector<16x32xf32>
    %6 = tpu.matmul %5, %0, %cst_6 {dimension_numbers = #tpu.dot_dimension_numbers<[1], [0], [0], [1], [0, 0, 1, 1], [], []>} : vector<16x8xbf16>, vector<8x32xbf16>, vector<16x32xf32> -> vector<16x32xf32>
    %c0_7 = arith.constant 0 : index
    %c0_8 = arith.constant 0 : index
    %c16 = arith.constant 16 : index
    %7 = vector.load %arg2[%c0_7, %c0_8, %c16] : memref<1x16x32xbf16, #tpu.memory_space<vmem>>, vector<1x16x8xbf16>
    %8 = vector.shape_cast %7 : vector<1x16x8xbf16> to vector<16x8xbf16>
    %cst_9 = arith.constant dense<0.000000e+00> : vector<16x32xf32>
    %9 = tpu.matmul %8, %0, %cst_9 {dimension_numbers = #tpu.dot_dimension_numbers<[1], [0], [0], [1], [0, 0, 1, 1], [], []>} : vector<16x8xbf16>, vector<8x32xbf16>, vector<16x32xf32> -> vector<16x32xf32>
    %10 = arith.maximumf %3, %9 : vector<16x32xf32>
    %c0_10 = arith.constant 0 : index
    %c0_11 = arith.constant 0 : index
    %c24 = arith.constant 24 : index
    %11 = vector.load %arg2[%c0_10, %c0_11, %c24] : memref<1x16x32xbf16, #tpu.memory_space<vmem>>, vector<1x16x8xbf16>
    %12 = vector.shape_cast %11 : vector<1x16x8xbf16> to vector<16x8xbf16>
    %cst_12 = arith.constant dense<0.000000e+00> : vector<16x32xf32>
    %13 = tpu.matmul %12, %0, %cst_12 {dimension_numbers = #tpu.dot_dimension_numbers<[1], [0], [0], [1], [0, 0, 1, 1], [], []>} : vector<16x8xbf16>, vector<8x32xbf16>, vector<16x32xf32> -> vector<16x32xf32>
    %14 = arith.maximumf %6, %13 : vector<16x32xf32>
    %15 = arith.maximumf %10, %14 : vector<16x32xf32>
    %c0_13 = arith.constant 0 : index
    %c0_14 = arith.constant 0 : index
    %c0_15 = arith.constant 0 : index
    %16 = vector.load %arg3[%c0_13, %c0_14, %c0_15] : memref<1x16x8xbf16, #tpu.memory_space<vmem>>, vector<1x16x8xbf16>
    %17 = vector.shape_cast %16 : vector<1x16x8xbf16> to vector<16x8xbf16>
    %cst_16 = arith.constant dense<0.000000e+00> : vector<16x32xf32>
    %18 = tpu.matmul %17, %0, %cst_16 {dimension_numbers = #tpu.dot_dimension_numbers<[1], [0], [0], [1], [0, 0, 1, 1], [], []>} : vector<16x8xbf16>, vector<8x32xbf16>, vector<16x32xf32> -> vector<16x32xf32>
    %c0_17 = arith.constant 0 : index
    %c0_18 = arith.constant 0 : index
    %19 = vector.load %arg5[%c0_17, %c0_18] : memref<3x32xf32, #tpu.memory_space<vmem>>, vector<3x32xf32>
    %20 = arith.subf %15, %18 : vector<16x32xf32>
    %21 = vector.extract_strided_slice %19 {offsets = [0, 0], sizes = [1, 32], strides = [1, 1]} : vector<3x32xf32> to vector<1x32xf32>
    %22 = vector.broadcast %21 : vector<1x32xf32> to vector<16x32xf32>
    %23 = arith.addf %20, %22 : vector<16x32xf32>
    %cst_19 = arith.constant dense<0.000000e+00> : vector<16xf32>
    %24 = vector.multi_reduction <add>, %23, %cst_19 [1] : vector<16x32xf32> to vector<16xf32>
    %25 = vector.shape_cast %24 : vector<16xf32> to vector<16x1xf32>
    %cst_20 = arith.constant 3.200000e+01 : f32
    %26 = vector.broadcast %cst_20 : f32 to vector<16x1xf32>
    %27 = arith.divf %25, %26 : vector<16x1xf32>
    %28 = vector.broadcast %27 : vector<16x1xf32> to vector<16x32xf32>
    %29 = arith.subf %23, %28 : vector<16x32xf32>
    %30 = arith.mulf %29, %29 : vector<16x32xf32>
    %cst_21 = arith.constant dense<0.000000e+00> : vector<16xf32>
    %31 = vector.multi_reduction <add>, %30, %cst_21 [1] : vector<16x32xf32> to vector<16xf32>
    %32 = vector.shape_cast %31 : vector<16xf32> to vector<16x1xf32>
    %cst_22 = arith.constant 3.200000e+01 : f32
    %33 = vector.broadcast %cst_22 : f32 to vector<16x1xf32>
    %34 = arith.divf %32, %33 : vector<16x1xf32>
    %cst_23 = arith.constant 9.99999974E-6 : f32
    %35 = vector.broadcast %cst_23 : f32 to vector<16x1xf32>
    %36 = arith.addf %34, %35 : vector<16x1xf32>
    %37 = math.rsqrt %36 : vector<16x1xf32>
    %38 = vector.broadcast %37 : vector<16x1xf32> to vector<16x32xf32>
    %39 = arith.mulf %29, %38 : vector<16x32xf32>
    %40 = vector.extract_strided_slice %19 {offsets = [1, 0], sizes = [1, 32], strides = [1, 1]} : vector<3x32xf32> to vector<1x32xf32>
    %41 = vector.broadcast %40 : vector<1x32xf32> to vector<16x32xf32>
    %42 = arith.mulf %39, %41 : vector<16x32xf32>
    %43 = vector.extract_strided_slice %19 {offsets = [2, 0], sizes = [1, 32], strides = [1, 1]} : vector<3x32xf32> to vector<1x32xf32>
    %44 = vector.broadcast %43 : vector<1x32xf32> to vector<16x32xf32>
    %45 = arith.addf %42, %44 : vector<16x32xf32>
    %c0_24 = arith.constant 0 : index
    %c0_25 = arith.constant 0 : index
    %c0_26 = arith.constant 0 : index
    %46 = vector.load %arg6[%c0_24, %c0_25, %c0_26] : memref<1x16x32xf32, #tpu.memory_space<vmem>>, vector<1x16x32xf32>
    %47 = vector.shape_cast %46 : vector<1x16x32xf32> to vector<16x32xf32>
    %48 = vector.shape_cast %45 : vector<16x32xf32> to vector<1x16x32xf32>
    tpu.vector_store %arg6[%c0_24, %c0_25, %c0_26], %48 {strides = array<i32>} : memref<1x16x32xf32, #tpu.memory_space<vmem>>, vector<1x16x32xf32>,
    return
  }
  func.func @transform_0(%arg0: i32, %arg1: i32) -> (i32, i32, i32) {
    %c0_i32 = arith.constant 0 : i32
    %c0_i32_0 = arith.constant 0 : i32
    return %arg0, %arg1, %c0_i32 : i32, i32, i32
  }
  func.func @transform_1(%arg0: i32, %arg1: i32) -> (i32, i32, i32) {
    %c0_i32 = arith.constant 0 : i32
    %c0_i32_0 = arith.constant 0 : i32
    return %arg0, %arg1, %c0_i32 : i32, i32, i32
  }
  func.func @transform_2(%arg0: i32, %arg1: i32) -> (i32, i32) {
    %c0_i32 = arith.constant 0 : i32
    %c0_i32_0 = arith.constant 0 : i32
    %c0_i32_1 = arith.constant 0 : i32
    return %c0_i32, %c0_i32_0 : i32, i32
  }
  func.func @transform_3(%arg0: i32, %arg1: i32) -> (i32, i32) {
    %c0_i32 = arith.constant 0 : i32
    %c0_i32_0 = arith.constant 0 : i32
    %c0_i32_1 = arith.constant 0 : i32
    return %c0_i32, %c0_i32_0 : i32, i32
  }
  func.func @transform_4(%arg0: i32, %arg1: i32) -> (i32, i32, i32) {
    %c0_i32 = arith.constant 0 : i32
    %c0_i32_0 = arith.constant 0 : i32
    return %arg0, %arg1, %c0_i32 : i32, i32, i32
  }
}

</mosaic_0001>

<llo_original>
// kernel: tpu_custom_call.1
$region0: #{tpu_custom_call.1}
  #allocation0 [shape = 'u32[]', space=smem, size = 0x4, offset = 0x4, fixed_abs, tag = 'smem constant byte address 0x4 - core index']
  #allocation1 [shape = 'u32[72,128]{1,0:T(1,128)}', space=vmem, size = 0x9000, scoped, tag = 'internal scratch']
  %s0 = inlined_call_operand.vmem [shape: bf16[2,16,32], index: 0, kind: input, shape index: {}]
  %s1 = inlined_call_operand.vmem [shape: bf16[2,16,8], index: 1, kind: input, shape index: {}]
  %s2 = inlined_call_operand.vmem [shape: bf16[8,32], index: 2, kind: input, shape index: {}]
  %s3 = inlined_call_operand.vmem [shape: f32[3,32], index: 3, kind: input, shape index: {}]
  %s4 = inlined_call_operand.hbm [shape: f32[2,16,32], index: 4, kind: output, shape index: {}]
  %s5 = sld [smem:[#allocation0]]
  $region49: #{tpu_custom_call.1} parent=0
    _
  %s7 = ssub.s32 1, %s5
  %s8 = scalar_select 0, %s7, %s5
  $region1: #{tpu_custom_call.1} parent=0
    #allocation2 [shape = 'u8[16384]{0}', space=vmem, size = 0x4000, scoped, tag = 'output window, operand 0']
    #allocation3 [shape = 's32[2]{0}', space=sflag, size = 0x8, scoped, tag = 'scoped memory for tpu_custom_call.1']
    %9 = vsyncpa [#allocation3], 0
    %s10 = scalar_lea.sflag [#allocation3], 1
    %11 = vsyncpa %s10, 0
    loop: start=0, step=1, limit=4
    $region2: #{tpu_custom_call.1} parent=1 // loop_pre_header
      _
    $region3: #{tpu_custom_call.1} parent=1 // loop_header
      %s13 = sphi 0, %s17
      %p14 = scmp.ge.s32.totalorder %s13, 4
      %s20 = sphi 0, %s32
      %s21 = sphi 0, %s28
      %s22 = sphi 0, %s20
      %s23 = sphi 0, %s21
      %s24 = sphi 0, %s22
      %s25 = sphi 0, %s23
      %s37 = sphi 0, %s39
      %s40 = sphi 0, %s37
      %s41 = sphi 0, %s40
      %s57 = sphi 0, %s41
      %s65 = sphi 0, %s67
      %s68 = sphi 0, %s65
      %s69 = sphi 0, %s68
      %s85 = sphi 0, %s69
      %s89 = sphi 0, %s89
      %s91 = sphi 0, %s89
      %s92 = sphi 0, %s91
      %s106 = sphi 0, %s92
      %s110 = sphi 0, %s110
      %s112 = sphi 0, %s110
      %s113 = sphi 0, %s112
      %s127 = sphi 0, %s113
      %s135 = sphi 0, %s137
      %s138 = sphi 0, %s135
      %s139 = sphi 0, %s138
      %s155 = sphi 0, %s139
    $region4: #{tpu_custom_call.1} parent=1 // loop_header_branch
      %16 = sbr.rel (%p14) target = $region8
    $region5: #{tpu_custom_call.1} parent=1 // loop_body
      %s18 = ssub.s32 %s13, 1
      %s19 = ssub.s32 %s13, 2
      %s26 = sadd.s32 1, %s21
      %p27 = scmp.ge.s32.totalorder %s26, 1
      %s28 = scalar_select %p27, 0, %s26
      %s29 = sadd.s32 1, %s20
      %s30 = scalar_select %p27, %s29, %s20
      %p31 = scmp.ge.s32.totalorder %s30, 2
      %s32 = scalar_select %p31, 0, %s30
      %s33 = ssub.s32 %s20, %s32
      %s34 = ssub.s32 %s21, %s28
      %s35 = sor.u32 %s33, %s34
      %p36 = scmp.eq.s32.totalorder %s35, 0
      %s38 = sadd.s32 %s37, 1
      %s39 = scalar_select %p36, %s37, %s38
      %p42 = pneg %p36
      %p43 = scmp.eq.s32.totalorder %s13, 1
      %p44 = por %p42, %p43
      %p45 = scmp.ne.s32.totalorder %s37, %s40
      %p46 = scmp.eq.s32.totalorder %s13, 0
      %p47 = por %p45, %p46
      %p48 = scmp.ne.s32.totalorder %s37, %s40
      %p49 = scmp.eq.s32.totalorder %s18, 1
      %p50 = por %p48, %p49
      %p51 = scmp.ne.s32.totalorder %s40, %s41
      %p52 = scmp.eq.s32.totalorder %s18, 0
      %p53 = por %p51, %p52
      %p54 = scmp.ne.s32.totalorder %s40, %s41
      %p55 = scmp.eq.s32.totalorder %s19, 1
      %p56 = por %p54, %p55
      %p58 = scmp.ne.s32.totalorder %s41, %s57
      %p59 = scmp.eq.s32.totalorder %s19, 0
      %p60 = por %p58, %p59
      %s61 = ssub.s32 %s20, %s32
      %s62 = ssub.s32 %s21, %s28
      %s63 = sor.u32 %s61, %s62
      %p64 = scmp.eq.s32.totalorder %s63, 0
      %s66 = sadd.s32 %s65, 1
      %s67 = scalar_select %p64, %s65, %s66
      %p70 = pneg %p64
      %p71 = scmp.eq.s32.totalorder %s13, 1
      %p72 = por %p70, %p71
      %p73 = scmp.ne.s32.totalorder %s65, %s68
      %p74 = scmp.eq.s32.totalorder %s13, 0
      %p75 = por %p73, %p74
      %p76 = scmp.ne.s32.totalorder %s65, %s68
      %p77 = scmp.eq.s32.totalorder %s18, 1
      %p78 = por %p76, %p77
      %p79 = scmp.ne.s32.totalorder %s68, %s69
      %p80 = scmp.eq.s32.totalorder %s18, 0
      %p81 = por %p79, %p80
      %p82 = scmp.ne.s32.totalorder %s68, %s69
      %p83 = scmp.eq.s32.totalorder %s19, 1
      %p84 = por %p82, %p83
      %p86 = scmp.ne.s32.totalorder %s69, %s85
      %p87 = scmp.eq.s32.totalorder %s19, 0
      %p88 = por %p86, %p87
      %s90 = sadd.s32 %s89, 1
      %p93 = scmp.eq.s32.totalorder %s13, 1
      %p94 = scmp.ne.s32.totalorder %s89, %s91
      %p95 = scmp.eq.s32.totalorder %s13, 0
      %p96 = por %p94, %p95
      %p97 = scmp.ne.s32.totalorder %s89, %s91
      %p98 = scmp.eq.s32.totalorder %s18, 1
      %p99 = por %p97, %p98
      %p100 = scmp.ne.s32.totalorder %s91, %s92
      %p101 = scmp.eq.s32.totalorder %s18, 0
      %p102 = por %p100, %p101
      %p103 = scmp.ne.s32.totalorder %s91, %s92
      %p104 = scmp.eq.s32.totalorder %s19, 1
      %p105 = por %p103, %p104
      %p107 = scmp.ne.s32.totalorder %s92, %s106
      %p108 = scmp.eq.s32.totalorder %s19, 0
      %p109 = por %p107, %p108
      %s111 = sadd.s32 %s110, 1
      %p114 = scmp.eq.s32.totalorder %s13, 1
      %p115 = scmp.ne.s32.totalorder %s110, %s112
      %p116 = scmp.eq.s32.totalorder %s13, 0
      %p117 = por %p115, %p116
      %p118 = scmp.ne.s32.totalorder %s110, %s112
      %p119 = scmp.eq.s32.totalorder %s18, 1
      %p120 = por %p118, %p119
      %p121 = scmp.ne.s32.totalorder %s112, %s113
      %p122 = scmp.eq.s32.totalorder %s18, 0
      %p123 = por %p121, %p122
      %p124 = scmp.ne.s32.totalorder %s112, %s113
      %p125 = scmp.eq.s32.totalorder %s19, 1
      %p126 = por %p124, %p125
      %p128 = scmp.ne.s32.totalorder %s113, %s127
      %p129 = scmp.eq.s32.totalorder %s19, 0
      %p130 = por %p128, %p129
      %s131 = ssub.s32 %s20, %s32
      %s132 = ssub.s32 %s21, %s28
      %s133 = sor.u32 %s131, %s132
      %p134 = scmp.eq.s32.totalorder %s133, 0
      %s136 = sadd.s32 %s135, 1
      %s137 = scalar_select %p134, %s135, %s136
      %p140 = pneg %p134
      %p141 = scmp.eq.s32.totalorder %s13, 1
      %p142 = por %p140, %p141
      %p143 = scmp.ne.s32.totalorder %s135, %s138
      %p144 = scmp.eq.s32.totalorder %s13, 0
      %p145 = por %p143, %p144
      %p146 = scmp.ne.s32.totalorder %s135, %s138
      %p147 = scmp.eq.s32.totalorder %s18, 1
      %p148 = por %p146, %p147
      %p149 = scmp.ne.s32.totalorder %s138, %s139
      %p150 = scmp.eq.s32.totalorder %s18, 0
      %p151 = por %p149, %p150
      %p152 = scmp.ne.s32.totalorder %s138, %s139
      %p153 = scmp.eq.s32.totalorder %s19, 1
      %p154 = por %p152, %p153
      %p156 = scmp.ne.s32.totalorder %s139, %s155
      %p157 = scmp.eq.s32.totalorder %s19, 0
      %p158 = por %p156, %p157
      %p159 = scmp.le.s32.totalorder 1, %s13
      %p160 = scmp.lt.s32.totalorder %s13, 3
      %p161 = pnand %p159, %p160
      %p162 = pneg %p161
      // Predicated region
      $region9: #{tpu_custom_call.1} parent=5 // pred_check
        _
      $region10: #{tpu_custom_call.1} parent=5 // pred_check_branch
        %164 = sbr.rel (%p161) target = $region12
      $region11: #{tpu_custom_call.1} parent=5 // pred_region
        %s165 = ssub.s32 %s13, 1
        // Predicated region
        $region13: #{tpu_custom_call.1} parent=11 // pred_check
          %p166 = pneg %p102
        $region14: #{tpu_custom_call.1} parent=11 // pred_check_branch
          %168 = sbr.rel (%p166) target = $region16
        $region15: #{tpu_custom_call.1} parent=11 // pred_region
          _
        $region16: #{tpu_custom_call.1} parent=11 // pred_fallthru
          _
        // Predicated region
        $region17: #{tpu_custom_call.1} parent=11 // pred_check
          %p169 = pneg %p123
        $region18: #{tpu_custom_call.1} parent=11 // pred_check_branch
          %171 = sbr.rel (%p169) target = $region20
        $region19: #{tpu_custom_call.1} parent=11 // pred_region
          _
        $region20: #{tpu_custom_call.1} parent=11 // pred_fallthru
          _
      $region12: #{tpu_custom_call.1} parent=5 // pred_fallthru
        _
      %p172 = scmp.lt.s32.totalorder %s13, 2
      // Predicated region
      $region21: #{tpu_custom_call.1} parent=5 // pred_check
        %p173 = pneg %p172
      $region22: #{tpu_custom_call.1} parent=5 // pred_check_branch
        %175 = sbr.rel (%p173) target = $region24
      $region23: #{tpu_custom_call.1} parent=5 // pred_region
        // Predicated region
        $region25: #{tpu_custom_call.1} parent=23 // pred_check
          %p176 = pneg %p47
        $region26: #{tpu_custom_call.1} parent=23 // pred_check_branch
          %178 = sbr.rel (%p176) target = $region28
        $region27: #{tpu_custom_call.1} parent=23 // pred_region
          %s179 = smul.u32 2, %s21
          %p180 = scmp.lt.s32.totalorder %s20, 1
          %s181 = scalar_select %p180, %s20, 1
          %p182 = scmp.lt.s32.totalorder %s179, 1
          %s183 = scalar_select %p182, %s179, 1
          %s184 = smul.addr %s181, 2
          %s185 = sadd.s32 %s183, %s184
          %s186 = smul.addr %s185, 4
          %s187 = scalar_lea.vmem %s0, %s186
          %s188 = smul.u32 2, %s21
        $region28: #{tpu_custom_call.1} parent=23 // pred_fallthru
          _
        // Predicated region
        $region29: #{tpu_custom_call.1} parent=23 // pred_check
          %p189 = pneg %p75
        $region30: #{tpu_custom_call.1} parent=23 // pred_check_branch
          %191 = sbr.rel (%p189) target = $region32
        $region31: #{tpu_custom_call.1} parent=23 // pred_region
          %s192 = smul.u32 2, %s21
          %p193 = scmp.lt.s32.totalorder %s20, 1
          %s194 = scalar_select %p193, %s20, 1
          %p195 = scmp.lt.s32.totalorder %s192, 1
          %s196 = scalar_select %p195, %s192, 1
          %s197 = smul.addr %s194, 2
          %s198 = sadd.s32 %s196, %s197
          %s199 = smul.addr %s198, 4
          %s200 = scalar_lea.vmem %s1, %s199
          %s201 = smul.u32 2, %s21
        $region32: #{tpu_custom_call.1} parent=23 // pred_fallthru
          _
      $region24: #{tpu_custom_call.1} parent=5 // pred_fallthru
        _
      %p202 = scmp.le.s32.totalorder 1, %s13
      %p203 = scmp.lt.s32.totalorder %s13, 3
      %p204 = pnand %p202, %p203
      %p205 = pneg %p204
      // Predicated region
      $region33: #{tpu_custom_call.1} parent=5 // pred_check
        _
      $region34: #{tpu_custom_call.1} parent=5 // pred_check_branch
        %207 = sbr.rel (%p204) target = $region36
      $region35: #{tpu_custom_call.1} parent=5 // pred_region
        %s208 = ssub.s32 %s13, 1
        %s209 = smul.u32 2, %s23
        %p210 = scmp.lt.s32.totalorder %s22, 1
        %s211 = scalar_select %p210, %s22, 1
        %p212 = scmp.lt.s32.totalorder %s209, 1
        %s213 = scalar_select %p212, %s209, 1
        %s214 = smul.addr %s211, 2
        %s215 = sadd.s32 %s213, %s214
        %s216 = smul.addr %s215, 4
        %s217 = scalar_lea.vmem %s0, %s216
        %p218 = pneg %p53
        %p219 = pneg %p50
        %s220 = smul.u32 2, %s23
        %p221 = scmp.lt.s32.totalorder %s22, 1
        %s222 = scalar_select %p221, %s22, 1
        %p223 = scmp.lt.s32.totalorder %s220, 1
        %s224 = scalar_select %p223, %s220, 1
        %s225 = smul.addr %s222, 2
        %s226 = sadd.s32 %s224, %s225
        %s227 = smul.addr %s226, 4
        %s228 = scalar_lea.vmem %s1, %s227
        %p229 = pneg %p81
        %p230 = pneg %p78
        %p231 = pneg %p102
        %p232 = pneg %p99
        %p233 = pneg %p123
        %p234 = pneg %p120
        %p235 = pneg %p151
        %p236 = pneg %p148
        %s237 = sand.u32 %s138, 1
        %s238 = scalar_lea.sflag [#allocation3], %s237
        %s239 = sand.u32 %s138, 1
        %s240 = smul.addr %s239, 16
        %s241 = scalar_lea.vmem [#allocation2], %s240
        %s242 = smul.u32 2, %s23
        %p243 = scmp.lt.s32.totalorder %s22, 1
        %s244 = scalar_select %p243, %s22, 1
        %p245 = scmp.lt.s32.totalorder %s242, 1
        %s246 = scalar_select %p245, %s242, 1
        %s247 = smul.addr %s244, 2
        %s248 = sadd.s32 %s246, %s247
        %s249 = smul.addr %s248, 4
        %s250 = scalar_lea.vmem %s0, %s249
        %s251 = smul.u32 2, %s23
        %s252 = smul.u32 2, %s23
        %p253 = scmp.lt.s32.totalorder %s22, 1
        %s254 = scalar_select %p253, %s22, 1
        %p255 = scmp.lt.s32.totalorder %s252, 1
        %s256 = scalar_select %p255, %s252, 1
        %s257 = smul.addr %s254, 2
        %s258 = sadd.s32 %s256, %s257
        %s259 = smul.addr %s258, 4
        %s260 = scalar_lea.vmem %s1, %s259
        %s261 = smul.u32 2, %s23
        %s262 = smul.u32 2, %s23
        %v264 = vld [vmem:[%s2] sm:$0xf]
        %v265 = vld [vmem:[%s250] sm:$0xf]
        %v266 = vld [vmem:[%s250 + $0x4] sm:$0xf]
        %v269 = vunpack.c.l.b16 %v265
        %v270 = vunpack.c.l.b16 %v266
        %v271 = vpack.c.b16 %v270, %v269
        %vm272 = vcmask 64512
        %v274 = vsel %vm272, %v271, 0
        %vm276 = vcmask 1043456
        %v278 = vsel %vm276, %v264, 0
        %280 = vmatpush.bf16.msra.mxu0 0
        %281 = vmatpush.bf16.msra.mxu0 0
        %282 = vmatpush.bf16.msra.mxu0 0
        %283 = vmatpush.bf16.msra.mxu0 0
        %284 = vmatpush.bf16.msra.mxu0 0
        %285 = vmatpush.bf16.msra.mxu0 0
        %286 = vmatpush.bf16.msra.mxu0 0
        %287 = vmatpush.bf16.msra.mxu0 %v278
        %288 = vmatmul.bf16.gmra.mxu0 %v274
        %v289 = vpop.f32.mrf.mxu0
        %v290 = vadd.f32 0.0, %v289
        %v291 = vpop.f32.mrf.mxu0
        %v292 = vadd.f32 0.0, %v291
        %293 = vdwg.mxu0
        %294 = vrot.lane.b32.xlu0 %v271, 120
        %v295 = vpop.permute.xlu0 %294
        %v297 = vsel %vm272, %v295, 0
        %299 = vmatpush.bf16.msra.mxu0 0
        %300 = vmatpush.bf16.msra.mxu0 0
        %301 = vmatpush.bf16.msra.mxu0 0
        %302 = vmatpush.bf16.msra.mxu0 0
        %303 = vmatpush.bf16.msra.mxu0 0
        %304 = vmatpush.bf16.msra.mxu0 0
        %305 = vmatpush.bf16.msra.mxu0 0
        %306 = vmatpush.bf16.msra.mxu0 %v278
        %307 = vmatmul.bf16.gmra.mxu0 %v297
        %v308 = vpop.f32.mrf.mxu0
        %v309 = vadd.f32 0.0, %v308
        %v310 = vpop.f32.mrf.mxu0
        %v311 = vadd.f32 0.0, %v310
        %312 = vdwg.mxu0
        %313 = vrot.lane.b32.xlu0 %v271, 112
        %v314 = vpop.permute.xlu0 %313
        %v316 = vsel %vm272, %v314, 0
        %318 = vmatpush.bf16.msra.mxu0 0
        %319 = vmatpush.bf16.msra.mxu0 0
        %320 = vmatpush.bf16.msra.mxu0 0
        %321 = vmatpush.bf16.msra.mxu0 0
        %322 = vmatpush.bf16.msra.mxu0 0
        %323 = vmatpush.bf16.msra.mxu0 0
        %324 = vmatpush.bf16.msra.mxu0 0
        %325 = vmatpush.bf16.msra.mxu0 %v278
        %326 = vmatmul.bf16.gmra.mxu0 %v316
        %v327 = vpop.f32.mrf.mxu0
        %v328 = vadd.f32 0.0, %v327
        %v329 = vpop.f32.mrf.mxu0
        %v330 = vadd.f32 0.0, %v329
        %331 = vdwg.mxu0
        %v332 = vmax.f32 %v290, %v328
        %v333 = vmax.f32 %v292, %v330
        %334 = vrot.lane.b32.xlu0 %v271, 104
        %v335 = vpop.permute.xlu0 %334
        %v337 = vsel %vm272, %v335, 0
        %339 = vmatpush.bf16.msra.mxu0 0
        %340 = vmatpush.bf16.msra.mxu0 0
        %341 = vmatpush.bf16.msra.mxu0 0
        %342 = vmatpush.bf16.msra.mxu0 0
        %343 = vmatpush.bf16.msra.mxu0 0
        %344 = vmatpush.bf16.msra.mxu0 0
        %345 = vmatpush.bf16.msra.mxu0 0
        %346 = vmatpush.bf16.msra.mxu0 %v278
        %347 = vmatmul.bf16.gmra.mxu0 %v337
        %v348 = vpop.f32.mrf.mxu0
        %v349 = vadd.f32 0.0, %v348
        %v350 = vpop.f32.mrf.mxu0
        %v351 = vadd.f32 0.0, %v350
        %352 = vdwg.mxu0
        %v353 = vmax.f32 %v309, %v349
        %v354 = vmax.f32 %v311, %v351
        %v355 = vmax.f32 %v332, %v353
        %v356 = vmax.f32 %v333, %v354
        %v357 = vld [vmem:[%s260] sm:$0xf]
        %v358 = vld [vmem:[%s260 + $0x4] sm:$0xf]
        %v361 = vunpack.c.l.b16 %v357
        %v362 = vunpack.c.l.b16 %v358
        %v363 = vpack.c.b16 %v362, %v361
        %v365 = vsel %vm272, %v363, 0
        %367 = vmatpush.bf16.msra.mxu0 0
        %368 = vmatpush.bf16.msra.mxu0 0
        %369 = vmatpush.bf16.msra.mxu0 0
        %370 = vmatpush.bf16.msra.mxu0 0
        %371 = vmatpush.bf16.msra.mxu0 0
        %372 = vmatpush.bf16.msra.mxu0 0
        %373 = vmatpush.bf16.msra.mxu0 0
        %374 = vmatpush.bf16.msra.mxu0 %v278
        %375 = vmatmul.bf16.gmra.mxu0 %v365
        %v376 = vpop.f32.mrf.mxu0
        %v377 = vadd.f32 0.0, %v376
        %v378 = vpop.f32.mrf.mxu0
        %v379 = vadd.f32 0.0, %v378
        %380 = vdwg.mxu0
        %v381 = vld [vmem:[%s3] sm:$0x7]
        %v382 = vsub.f32 %v355, %v377
        %v383 = vsub.f32 %v356, %v379
        %v384 = vperm.slane %v381, 0
        %v385 = vadd.f32 %v382, %v384
        %v386 = vadd.f32 %v383, %v384
        %vm387 = vcmask 261120
        %v388 = vsel %vm387, %v385, 0.0
        %389 = vadd.xlane.f32.xlu0 %v388
        %v390 = vpop.xlane.xlu0 %389
        %v391 = vsel %vm387, %v386, 0.0
        %392 = vadd.xlane.f32.xlu0 %v391
        %v393 = vpop.xlane.xlu0 %392
        %v394 = vrcp.pop 32.0
        %v395 = vmul.f32 32.0, %v394
        %v396 = vsub.f32 1.0, %v395
        %v397 = vmul.f32 %v394, %v396
        %v398 = vadd.f32 %v394, %v397
        %vm399 = vweird.f32 %v394
        %v400 = vsel %vm399, %v394, %v398
        %v401 = vmul.f32 %v390, %v400
        %v402 = vmul.f32 %v393, %v400
        %v403 = vsub.f32 %v385, %v401
        %v404 = vsub.f32 %v386, %v402
        %v405 = vmul.f32 %v403, %v403
        %v406 = vmul.f32 %v404, %v404
        %v407 = vsel %vm387, %v405, 0.0
        %408 = vadd.xlane.f32.xlu0 %v407
        %v409 = vpop.xlane.xlu0 %408
        %v410 = vsel %vm387, %v406, 0.0
        %411 = vadd.xlane.f32.xlu0 %v410
        %v412 = vpop.xlane.xlu0 %411
        %v413 = vmul.f32 %v409, %v400
        %v414 = vmul.f32 %v412, %v400
        %v415 = vadd.f32 %v413, 1e-05
        %v416 = vadd.f32 %v414, 1e-05
        %v417 = vrsqrt.pop %v415
        %v418 = vmul.f32 %v417, %v415
        %v419 = vmul.f32 %v418, %v417
        %v420 = vmul.f32 0.5, %v419
        %v421 = vsub.f32 1.5, %v420
        %v422 = vmul.f32 %v417, %v421
        %vm423 = vweird.f32 %v415
        %vm424 = vweird.f32 %v417
        %vm425 = vmor %vm423, %vm424
        %v426 = vsel %vm425, %v417, %v422
        %v427 = vrsqrt.pop %v416
        %v428 = vmul.f32 %v427, %v416
        %v429 = vmul.f32 %v428, %v427
        %v430 = vmul.f32 0.5, %v429
        %v431 = vsub.f32 1.5, %v430
        %v432 = vmul.f32 %v427, %v431
        %vm433 = vweird.f32 %v416
        %vm434 = vweird.f32 %v427
        %vm435 = vmor %vm433, %vm434
        %v436 = vsel %vm435, %v427, %v432
        %v437 = vmul.f32 %v403, %v426
        %v438 = vmul.f32 %v404, %v436
        %v439 = vperm.slane %v381, 1
        %v440 = vmul.f32 %v437, %v439
        %v441 = vmul.f32 %v438, %v439
        %v442 = vperm.slane %v381, 2
        %v443 = vadd.f32 %v440, %v442
        %v444 = vadd.f32 %v441, %v442
        %445 = vst.msk [vmem:[%s241] sm:$0xff] %vm387, %v443
        %446 = vst.msk [vmem:[%s241 + $0x8] sm:$0xff] %vm387, %v444
        %s447 = sand.u32 %s138, 1
        %s448 = scalar_lea.sflag [#allocation3], %s447
        %s449 = sand.u32 %s138, 1
        %s450 = smul.addr %s449, 16
        %s451 = scalar_lea.vmem [#allocation2], %s450
        // Predicated region
        $region37: #{tpu_custom_call.1} parent=35 // pred_check
          %p452 = pneg %p148
        $region38: #{tpu_custom_call.1} parent=35 // pred_check_branch
          %454 = sbr.rel (%p452) target = $region40
        $region39: #{tpu_custom_call.1} parent=35 // pred_region
          %s455 = smul.u32 2, %s23
          %457 = vsyncadd %s448, 0
          %s458 = smul.addr %s22, 2
          %s459 = sadd.s32 %s455, %s458
          %s460 = smul.addr %s459, 8
          %s461 = scalar_lea.hbm %s4, %s460
          %s462 = sshll.u32 %s451, 4
          %s463 = int_to_ptr.vmem [resolvable:$true] %s462
          %s464 = sshll.u32 %s461, 4
          %s465 = int_to_ptr.hbm [resolvable:$true] %s464
          %470 = dma.vmem_to_hbm [thread:$0]  %s463, 256, %s465, %s448, 128, 128, 8
        $region40: #{tpu_custom_call.1} parent=35 // pred_fallthru
          _
      $region36: #{tpu_custom_call.1} parent=5 // pred_fallthru
        _
      %p471 = scmp.le.s32.totalorder 2, %s13
      // Predicated region
      $region41: #{tpu_custom_call.1} parent=5 // pred_check
        %p472 = pneg %p471
      $region42: #{tpu_custom_call.1} parent=5 // pred_check_branch
        %474 = sbr.rel (%p472) target = $region44
      $region43: #{tpu_custom_call.1} parent=5 // pred_region
        %s475 = ssub.s32 %s13, 2
        // Predicated region
        $region45: #{tpu_custom_call.1} parent=43 // pred_check
          %p476 = pneg %p154
        $region46: #{tpu_custom_call.1} parent=43 // pred_check_branch
          %478 = sbr.rel (%p476) target = $region48
        $region47: #{tpu_custom_call.1} parent=43 // pred_region
          %s479 = sand.u32 %s139, 1
          %s480 = scalar_lea.sflag [#allocation3], %s479
          %s481 = sand.u32 %s139, 1
          %s482 = smul.addr %s481, 16
          %s483 = scalar_lea.vmem [#allocation2], %s482
          %485 = dma.done %s480, 256
        $region48: #{tpu_custom_call.1} parent=43 // pred_fallthru
          _
      $region44: #{tpu_custom_call.1} parent=5 // pred_fallthru
        _
    $region6: #{tpu_custom_call.1} parent=1 // loop_footer
      %s17 = sadd.s32 1, %s13
    $region7: #{tpu_custom_call.1} parent=1 // loop_footer_branch
      %12 = sbr.rel target = $region3
    $region8: #{tpu_custom_call.1} parent=1 // loop_exit
      _
    %486 = vsyncpa [#allocation3], 1
    %s487 = scalar_lea.sflag [#allocation3], 1
    %488 = vsyncpa %s487, 1

</llo_original>
